<compile_context>
chip_gen: v7x
topology: tpu7x:2x2x1
jax: 0.10.0
libtpu: 0.0.40
codegen_flags: <defaults>
</compile_context>

<pallas_src>
import jax
import jax.numpy as jnp
import numpy as np
from jax.experimental import pallas as pl
from jax.experimental.pallas import tpu as pltpu

OUT_PAD = 128   # lane-dense padded width of the 10-class output
EPS = 1e-5


def classifier_kernel(x_ref, we1_ref, be1_ref, wf_ref, bf_ref,
                      w2_ref, b2_ref, w3_ref, b3_ref, out_ref):
    """4 MXU matmuls (bf16 operands, f32 accumulate) + f32 bias/ReLU epilogues."""
    x = x_ref[...].astype(jnp.bfloat16)
    # encoder Linear1 + ReLU
    h = jnp.dot(x, we1_ref[...], preferred_element_type=jnp.float32) + be1_ref[...]
    h = jnp.maximum(h, 0.0).astype(jnp.bfloat16)
    # fused (encoder Linear2 @ head Linear1) with BN1 folded in, + ReLU
    a = jnp.dot(h, wf_ref[...], preferred_element_type=jnp.float32) + bf_ref[...]
    a = jnp.maximum(a, 0.0).astype(jnp.bfloat16)
    # head Linear2 with BN2 folded in, + ReLU
    b = jnp.dot(a, w2_ref[...], preferred_element_type=jnp.float32) + b2_ref[...]
    b = jnp.maximum(b, 0.0).astype(jnp.bfloat16)
    # head output Linear, zero-padded to 128 lanes; bf16 lane-dense store
    out_ref[...] = (
        jnp.dot(b, w3_ref[...], preferred_element_type=jnp.float32) + b3_ref[...]
    ).astype(out_ref.dtype)


def prepare_params(params):
    """One-time offline fold of raw module params into the fused kernel params.

    All folds are done in f32; matmul weights are then cast to bf16 (MXU
    operands), biases stay f32 (epilogue math stays f32 — matters on v5e).
    """
    (we1, be1, we2, be2,
     w1, b1, g1, bt1, rm1, rv1,
     w2, b2, g2, bt2, rm2, rv2,
     w3, b3) = params

    # Fuse encoder Linear2 with head Linear1 (no nonlinearity between): exact.
    wf = we2 @ w1                       # (H_enc, 256)
    bf = be2 @ w1 + b1                  # (1, 256)

    # Fold eval-mode BN1 into the fused linear.
    s1 = g1 * jax.lax.rsqrt(rv1 + EPS)  # (1, 256)
    wf = wf * s1
    bf = (bf - rm1) * s1 + bt1

    # Fold eval-mode BN2 into head Linear2.
    s2 = g2 * jax.lax.rsqrt(rv2 + EPS)  # (1, 128)
    w2f = w2 * s2
    b2f = (b2 - rm2) * s2 + bt2

    # Zero-pad the final Linear from 10 -> OUT_PAD output columns.
    w3p = jnp.zeros((w3.shape[0], OUT_PAD), jnp.float32).at[:, :10].set(w3)
    b3p = jnp.zeros((1, OUT_PAD), jnp.float32).at[:, :10].set(b3)

    bf16 = jnp.bfloat16
    return (we1.astype(bf16), be1,
            wf.astype(bf16), bf,
            w2f.astype(bf16), b2f,
            w3p.astype(bf16), b3p)


def _pick_tb(B, tb_max=512):
    """Row tile: multiple of 8, capped at tb_max, aiming for >=2 grid steps
    (v7x has 2 TensorCores; the batch grid is the only shardable axis)."""
    half = 8 * pl.cdiv(pl.cdiv(B, 2), 8)
    return int(max(8, min(tb_max, half)))


def classifier_forward(x, fused_params, *, tb=None):
    """Batched-grid Pallas call: x/out tiled over rows, weights VMEM-resident.

    No wrapper-side padding of x: the ragged edge block (if any) is masked by
    Pallas; garbage rows never reach stored output rows (rows are independent).
    Returns bf16 logits of shape (B, 10).
    """
    we1, be1, wf, bf, w2, b2, w3, b3 = fused_params
    B, d_in = x.shape
    h_enc = we1.shape[1]

    if tb is None:
        tb = _pick_tb(B)
    n_steps = pl.cdiv(B, tb)

    def resident(arr):
        # Same block every grid step -> DMA'd once, stays in VMEM.
        return pl.BlockSpec(arr.shape, lambda i: (0, 0))

    rows = n_steps * tb
    flops = 2 * rows * (d_in * h_enc + h_enc * wf.shape[1]
                        + wf.shape[1] * w2.shape[1] + w2.shape[1] * OUT_PAD)
    bytes_accessed = (4 * B * d_in                                   # x (f32)
                      + 2 * B * OUT_PAD                              # out (bf16)
                      + 2 * (we1.size + wf.size + w2.size + w3.size)  # bf16 weights
                      + 4 * (be1.size + bf.size + b2.size + b3.size))  # f32 biases

    out = pl.pallas_call(
        classifier_kernel,
        out_shape=jax.ShapeDtypeStruct((B, OUT_PAD), jnp.bfloat16),
        grid=(n_steps,),
        in_specs=[
            pl.BlockSpec((tb, d_in), lambda i: (i, 0)),
            resident(we1), resident(be1),
            resident(wf), resident(bf),
            resident(w2), resident(b2),
            resident(w3), resident(b3),
        ],
        out_specs=pl.BlockSpec((tb, OUT_PAD), lambda i: (i, 0)),
        compiler_params=pltpu.CompilerParams(
            dimension_semantics=("parallel",),
            vmem_limit_bytes=16 * 1024 * 1024,
        ),
        cost_estimate=pl.CostEstimate(
            flops=int(flops), transcendentals=0, bytes_accessed=int(bytes_accessed)),
    )(x, we1, be1, wf, bf, w2, b2, w3, b3)

    return out[:, :10]


def classifier_forward_ref(x, params):
    """Pure-JAX f32 reference on the ORIGINAL (unfused) params."""
    (we1, be1, we2, be2,
     w1, b1, g1, bt1, rm1, rv1,
     w2, b2, g2, bt2, rm2, rv2,
     w3, b3) = params
    h = jnp.maximum(x @ we1 + be1, 0.0)
    z = h @ we2 + be2
    a = z @ w1 + b1
    a = jnp.maximum((a - rm1) / jnp.sqrt(rv1 + EPS) * g1 + bt1, 0.0)
    b = a @ w2 + b2
    b = jnp.maximum((b - rm2) / jnp.sqrt(rv2 + EPS) * g2 + bt2, 0.0)
    return b @ w3 + b3


def make_params(key, d_in, h_enc, latent):
    """Deterministic synthetic parameters (shapes from Classifier.__init__)."""
    ks = jax.random.split(key, 16)

    def lin(kw, kb, fan_in, fan_out):
        w = jax.random.normal(kw, (fan_in, fan_out), jnp.float32) * 0.05
        b = jax.random.normal(kb, (1, fan_out), jnp.float32) * 0.01
        return w, b

    we1, be1 = lin(ks[0], ks[1], d_in, h_enc)
    we2, be2 = lin(ks[2], ks[3], h_enc, latent)
    w1, b1 = lin(ks[4], ks[5], latent, 256)
    w2, b2 = lin(ks[6], ks[7], 256, 128)
    w3, b3 = lin(ks[8], ks[9], 128, 10)

    def bn(kg, kb, n):
        g = 1.0 + 0.1 * jax.random.normal(kg, (1, n), jnp.float32)
        beta = 0.1 * jax.random.normal(kb, (1, n), jnp.float32)
        rm = 0.05 * jax.random.normal(jax.random.fold_in(kg, 1), (1, n), jnp.float32)
        rv = 1.0 + 0.1 * jax.random.uniform(jax.random.fold_in(kb, 1), (1, n), jnp.float32)
        return g, beta, rm, rv

    g1, bt1, rm1, rv1 = bn(ks[10], ks[11], 256)
    g2, bt2, rm2, rv2 = bn(ks[12], ks[13], 128)

    return (we1, be1, we2, be2,
            w1, b1, g1, bt1, rm1, rv1,
            w2, b2, g2, bt2, rm2, rv2,
            w3, b3)


if __name__ == "__main__":
    key = jax.random.PRNGKey(0)
    k_x, k_p = jax.random.split(key)

    B, D_IN, H_ENC, LATENT = 8, 256, 128, 32

    x = jax.random.normal(k_x, (B, D_IN), jnp.float32)
    params = make_params(k_p, D_IN, H_ENC, LATENT)
    fused = prepare_params(params)          # one-time offline fold (weights -> bf16)

    out = classifier_forward(x, fused)
    out = jax.block_until_ready(out)

    ref = classifier_forward_ref(x, params)
    assert out.shape == (B, 10)
    # bf16 MXU operands + bf16 output store -> loosened tolerance vs f32 ref.
    np.testing.assert_allclose(np.asarray(out, dtype=np.float32),
                               np.asarray(ref), rtol=2e-2, atol=2e-2)
    # Argmax (what getAcc uses) must match exactly.
    assert np.array_equal(np.asarray(out, dtype=np.float32).argmax(-1),
                          np.asarray(ref).argmax(-1))

    print("KERNEL_OK")
</pallas_src>

<mosaic_0001>
module attributes {stable_mosaic.version = 11 : i64} {
  func.func @classifier_kernel(%arg0: i32, %arg1: memref<8x256xf32, #tpu.memory_space<vmem>>, %arg2: memref<256x128xbf16, #tpu.memory_space<vmem>>, %arg3: memref<1x128xf32, #tpu.memory_space<vmem>>, %arg4: memref<128x256xbf16, #tpu.memory_space<vmem>>, %arg5: memref<1x256xf32, #tpu.memory_space<vmem>>, %arg6: memref<256x128xbf16, #tpu.memory_space<vmem>>, %arg7: memref<1x128xf32, #tpu.memory_space<vmem>>, %arg8: memref<128x128xbf16, #tpu.memory_space<vmem>>, %arg9: memref<1x128xf32, #tpu.memory_space<vmem>>, %arg10: memref<8x128xbf16, #tpu.memory_space<vmem>>) attributes {dimension_semantics = [#tpu.dimension_semantics<parallel>], iteration_bounds = array<i64: 1>, scalar_prefetch = 0 : i64, scratch_operands = 0 : i64, tpu.core_type = #tpu.core_type<tc>, window_params = [{transform_indices = @transform_0, window_bounds = array<i64: 8, 256>}, {pipeline_mode = #tpu.pipeline_mode<synchronous>, transform_indices = @transform_1, window_bounds = array<i64: 256, 128>}, {pipeline_mode = #tpu.pipeline_mode<synchronous>, transform_indices = @transform_2, window_bounds = array<i64: 1, 128>}, {pipeline_mode = #tpu.pipeline_mode<synchronous>, transform_indices = @transform_3, window_bounds = array<i64: 128, 256>}, {pipeline_mode = #tpu.pipeline_mode<synchronous>, transform_indices = @transform_4, window_bounds = array<i64: 1, 256>}, {pipeline_mode = #tpu.pipeline_mode<synchronous>, transform_indices = @transform_5, window_bounds = array<i64: 256, 128>}, {pipeline_mode = #tpu.pipeline_mode<synchronous>, transform_indices = @transform_6, window_bounds = array<i64: 1, 128>}, {pipeline_mode = #tpu.pipeline_mode<synchronous>, transform_indices = @transform_7, window_bounds = array<i64: 128, 128>}, {pipeline_mode = #tpu.pipeline_mode<synchronous>, transform_indices = @transform_8, window_bounds = array<i64: 1, 128>}, {transform_indices = @transform_9, window_bounds = array<i64: 8, 128>}]} {
    %c0 = arith.constant 0 : index
    %c0_0 = arith.constant 0 : index
    %0 = vector.load %arg1[%c0, %c0_0] : memref<8x256xf32, #tpu.memory_space<vmem>>, vector<8x256xf32>
    %1 = arith.truncf %0 : vector<8x256xf32> to vector<8x256xbf16>
    %c0_1 = arith.constant 0 : index
    %c0_2 = arith.constant 0 : index
    %2 = vector.load %arg2[%c0_1, %c0_2] : memref<256x128xbf16, #tpu.memory_space<vmem>>, vector<256x128xbf16>
    %cst = arith.constant dense<0.000000e+00> : vector<8x128xf32>
    %3 = tpu.matmul %1, %2, %cst {dimension_numbers = #tpu.dot_dimension_numbers<[1], [0], [0], [1], [0, 0, 1, 1], [], []>} : vector<8x256xbf16>, vector<256x128xbf16>, vector<8x128xf32> -> vector<8x128xf32>
    %c0_3 = arith.constant 0 : index
    %c0_4 = arith.constant 0 : index
    %4 = vector.load %arg3[%c0_3, %c0_4] : memref<1x128xf32, #tpu.memory_space<vmem>>, vector<1x128xf32>
    %5 = vector.broadcast %4 : vector<1x128xf32> to vector<8x128xf32>
    %6 = arith.addf %3, %5 : vector<8x128xf32>
    %cst_5 = arith.constant 0.000000e+00 : f32
    %7 = vector.broadcast %cst_5 : f32 to vector<8x128xf32>
    %8 = arith.maximumf %6, %7 : vector<8x128xf32>
    %9 = arith.truncf %8 : vector<8x128xf32> to vector<8x128xbf16>
    %c0_6 = arith.constant 0 : index
    %c0_7 = arith.constant 0 : index
    %10 = vector.load %arg4[%c0_6, %c0_7] : memref<128x256xbf16, #tpu.memory_space<vmem>>, vector<128x256xbf16>
    %cst_8 = arith.constant dense<0.000000e+00> : vector<8x256xf32>
    %11 = tpu.matmul %9, %10, %cst_8 {dimension_numbers = #tpu.dot_dimension_numbers<[1], [0], [0], [1], [0, 0, 1, 1], [], []>} : vector<8x128xbf16>, vector<128x256xbf16>, vector<8x256xf32> -> vector<8x256xf32>
    %c0_9 = arith.constant 0 : index
    %c0_10 = arith.constant 0 : index
    %12 = vector.load %arg5[%c0_9, %c0_10] : memref<1x256xf32, #tpu.memory_space<vmem>>, vector<1x256xf32>
    %13 = vector.broadcast %12 : vector<1x256xf32> to vector<8x256xf32>
    %14 = arith.addf %11, %13 : vector<8x256xf32>
    %cst_11 = arith.constant 0.000000e+00 : f32
    %15 = vector.broadcast %cst_11 : f32 to vector<8x256xf32>
    %16 = arith.maximumf %14, %15 : vector<8x256xf32>
    %17 = arith.truncf %16 : vector<8x256xf32> to vector<8x256xbf16>
    %c0_12 = arith.constant 0 : index
    %c0_13 = arith.constant 0 : index
    %18 = vector.load %arg6[%c0_12, %c0_13] : memref<256x128xbf16, #tpu.memory_space<vmem>>, vector<256x128xbf16>
    %cst_14 = arith.constant dense<0.000000e+00> : vector<8x128xf32>
    %19 = tpu.matmul %17, %18, %cst_14 {dimension_numbers = #tpu.dot_dimension_numbers<[1], [0], [0], [1], [0, 0, 1, 1], [], []>} : vector<8x256xbf16>, vector<256x128xbf16>, vector<8x128xf32> -> vector<8x128xf32>
    %c0_15 = arith.constant 0 : index
    %c0_16 = arith.constant 0 : index
    %20 = vector.load %arg7[%c0_15, %c0_16] : memref<1x128xf32, #tpu.memory_space<vmem>>, vector<1x128xf32>
    %21 = vector.broadcast %20 : vector<1x128xf32> to vector<8x128xf32>
    %22 = arith.addf %19, %21 : vector<8x128xf32>
    %cst_17 = arith.constant 0.000000e+00 : f32
    %23 = vector.broadcast %cst_17 : f32 to vector<8x128xf32>
    %24 = arith.maximumf %22, %23 : vector<8x128xf32>
    %25 = arith.truncf %24 : vector<8x128xf32> to vector<8x128xbf16>
    %c0_18 = arith.constant 0 : index
    %c0_19 = arith.constant 0 : index
    %26 = vector.load %arg8[%c0_18, %c0_19] : memref<128x128xbf16, #tpu.memory_space<vmem>>, vector<128x128xbf16>
    %cst_20 = arith.constant dense<0.000000e+00> : vector<8x128xf32>
    %27 = tpu.matmul %25, %26, %cst_20 {dimension_numbers = #tpu.dot_dimension_numbers<[1], [0], [0], [1], [0, 0, 1, 1], [], []>} : vector<8x128xbf16>, vector<128x128xbf16>, vector<8x128xf32> -> vector<8x128xf32>
    %c0_21 = arith.constant 0 : index
    %c0_22 = arith.constant 0 : index
    %28 = vector.load %arg9[%c0_21, %c0_22] : memref<1x128xf32, #tpu.memory_space<vmem>>, vector<1x128xf32>
    %29 = vector.broadcast %28 : vector<1x128xf32> to vector<8x128xf32>
    %30 = arith.addf %27, %29 : vector<8x128xf32>
    %31 = arith.truncf %30 : vector<8x128xf32> to vector<8x128xbf16>
    %c0_23 = arith.constant 0 : index
    %c0_24 = arith.constant 0 : index
    %32 = vector.load %arg10[%c0_23, %c0_24] : memref<8x128xbf16, #tpu.memory_space<vmem>>, vector<8x128xbf16>
    tpu.vector_store %arg10[%c0_23, %c0_24], %31 {strides = array<i32>} : memref<8x128xbf16, #tpu.memory_space<vmem>>, vector<8x128xbf16>,
    return
  }
  func.func @transform_0(%arg0: i32) -> (i32, i32) {
    %c0_i32 = arith.constant 0 : i32
    %c0_i32_0 = arith.constant 0 : i32
    return %arg0, %c0_i32 : i32, i32
  }
  func.func @transform_1(%arg0: i32) -> (i32, i32) {
    %c0_i32 = arith.constant 0 : i32
    %c0_i32_0 = arith.constant 0 : i32
    %c0_i32_1 = arith.constant 0 : i32
    return %c0_i32, %c0_i32_0 : i32, i32
  }
  func.func @transform_2(%arg0: i32) -> (i32, i32) {
    %c0_i32 = arith.constant 0 : i32
    %c0_i32_0 = arith.constant 0 : i32
    %c0_i32_1 = arith.constant 0 : i32
    return %c0_i32, %c0_i32_0 : i32, i32
  }
  func.func @transform_3(%arg0: i32) -> (i32, i32) {
    %c0_i32 = arith.constant 0 : i32
    %c0_i32_0 = arith.constant 0 : i32
    %c0_i32_1 = arith.constant 0 : i32
    return %c0_i32, %c0_i32_0 : i32, i32
  }
  func.func @transform_4(%arg0: i32) -> (i32, i32) {
    %c0_i32 = arith.constant 0 : i32
    %c0_i32_0 = arith.constant 0 : i32
    %c0_i32_1 = arith.constant 0 : i32
    return %c0_i32, %c0_i32_0 : i32, i32
  }
  func.func @transform_5(%arg0: i32) -> (i32, i32) {
    %c0_i32 = arith.constant 0 : i32
    %c0_i32_0 = arith.constant 0 : i32
    %c0_i32_1 = arith.constant 0 : i32
    return %c0_i32, %c0_i32_0 : i32, i32
  }
  func.func @transform_6(%arg0: i32) -> (i32, i32) {
    %c0_i32 = arith.constant 0 : i32
    %c0_i32_0 = arith.constant 0 : i32
    %c0_i32_1 = arith.constant 0 : i32
    return %c0_i32, %c0_i32_0 : i32, i32
  }
  func.func @transform_7(%arg0: i32) -> (i32, i32) {
    %c0_i32 = arith.constant 0 : i32
    %c0_i32_0 = arith.constant 0 : i32
    %c0_i32_1 = arith.constant 0 : i32
    return %c0_i32, %c0_i32_0 : i32, i32
  }
  func.func @transform_8(%arg0: i32) -> (i32, i32) {
    %c0_i32 = arith.constant 0 : i32
    %c0_i32_0 = arith.constant 0 : i32
    %c0_i32_1 = arith.constant 0 : i32
    return %c0_i32, %c0_i32_0 : i32, i32
  }
  func.func @transform_9(%arg0: i32) -> (i32, i32) {
    %c0_i32 = arith.constant 0 : i32
    %c0_i32_0 = arith.constant 0 : i32
    return %arg0, %c0_i32 : i32, i32
  }
}

</mosaic_0001>

<llo_original>
// kernel: tpu_custom_call.1
$region0: #{tpu_custom_call.1}
  #allocation0 [shape = 'u32[]', space=smem, size = 0x4, offset = 0x4, fixed_abs, tag = 'smem constant byte address 0x4 - core index']
  #allocation1 [shape = 'u32[144,128]{1,0:T(1,128)}', space=vmem, size = 0x12000, scoped, tag = 'internal scratch']
  %s0 = inlined_call_operand.hbm [shape: f32[8,256], index: 0, kind: input, shape index: {}]
  %s1 = inlined_call_operand.hbm [shape: bf16[256,128], index: 1, kind: input, shape index: {}]
  %s2 = inlined_call_operand.vmem [shape: f32[1,128], index: 2, kind: input, shape index: {}]
  %s3 = inlined_call_operand.hbm [shape: bf16[128,256], index: 3, kind: input, shape index: {}]
  %s4 = inlined_call_operand.vmem [shape: f32[1,256], index: 4, kind: input, shape index: {}]
  %s5 = inlined_call_operand.hbm [shape: bf16[256,128], index: 5, kind: input, shape index: {}]
  %s6 = inlined_call_operand.vmem [shape: f32[1,128], index: 6, kind: input, shape index: {}]
  %s7 = inlined_call_operand.hbm [shape: bf16[128,128], index: 7, kind: input, shape index: {}]
  %s8 = inlined_call_operand.vmem [shape: f32[1,128], index: 8, kind: input, shape index: {}]
  %s9 = inlined_call_operand.hbm [shape: bf16[8,128], index: 9, kind: output, shape index: {}]
  %s10 = sld [smem:[#allocation0]]
  $region66: #{tpu_custom_call.1} parent=0
    _
  %s12 = ssub.s32 1, %s10
  %s13 = scalar_select 0, %s12, %s10
  $region1: #{tpu_custom_call.1} parent=0
    #allocation2 [shape = 'u8[8192]{0}', space=vmem, size = 0x2000, scoped, tag = 'input window, operand 0, single buffered']
    #allocation3 [shape = 's32[1]{0}', space=sflag, size = 0x4, scoped, tag = 'scoped memory for tpu_custom_call.1']
    #allocation4 [shape = 's32[1]{0}', space=sflag, size = 0x4, scoped, tag = 'scoped memory for tpu_custom_call.1']
    #allocation5 [shape = 'u8[65536]{0}', space=vmem, size = 0x10000, scoped, tag = 'input window, operand 1, single buffered']
    #allocation6 [shape = 's32[1]{0}', space=sflag, size = 0x4, scoped, tag = 'scoped memory for tpu_custom_call.1']
    #allocation7 [shape = 'u8[65536]{0}', space=vmem, size = 0x10000, scoped, tag = 'input window, operand 3, single buffered']
    #allocation8 [shape = 'u8[65536]{0}', space=vmem, size = 0x10000, scoped, tag = 'input window, operand 5, single buffered']
    #allocation9 [shape = 's32[1]{0}', space=sflag, size = 0x4, scoped, tag = 'scoped memory for tpu_custom_call.1']
    #allocation10 [shape = 'u8[32768]{0}', space=vmem, size = 0x8000, scoped, tag = 'input window, operand 7, single buffered']
    #allocation11 [shape = 'u8[2048]{0}', space=vmem, size = 0x800, scoped, tag = 'output window, operand 0, single buffered']
    %14 = vsyncpa [#allocation3], 0
    %15 = vsyncpa [#allocation6], 0
    %16 = vsyncpa [#allocation9], 0
    %17 = vsyncpa [#allocation4], 0
    // Predicated region
    $region2: #{tpu_custom_call.1} parent=1 // pred_check
      _
    $region3: #{tpu_custom_call.1} parent=1 // pred_check_branch
      %19 = sbr.rel (0) target = $region5
    $region4: #{tpu_custom_call.1} parent=1 // pred_region
      %s21 = ssub.s32 256, 256
      %22 = vsyncadd [#allocation3], %s21
      %s24 = sshll.u32 [#allocation2], 4
      %s25 = int_to_ptr.vmem [resolvable:$true] %s24
      %27 = dma.hbm_to_vmem [thread:$0]  %s0, 256, %s25, [#allocation3]
    $region5: #{tpu_custom_call.1} parent=1 // pred_fallthru
      _
    // Predicated region
    $region6: #{tpu_custom_call.1} parent=1 // pred_check
      _
    $region7: #{tpu_custom_call.1} parent=1 // pred_check_branch
      %29 = sbr.rel (0) target = $region9
    $region8: #{tpu_custom_call.1} parent=1 // pred_region
      %s31 = ssub.s32 2048, 2048
      %32 = vsyncadd [#allocation6], %s31
      %s33 = sshll.u32 [#allocation5], 4
      %s34 = int_to_ptr.vmem [resolvable:$true] %s33
      %39 = dma.hbm_to_vmem [thread:$0]  %s1, 2048, %s34, [#allocation6], 64, 64, 4
    $region9: #{tpu_custom_call.1} parent=1 // pred_fallthru
      _
    // Predicated region
    $region10: #{tpu_custom_call.1} parent=1 // pred_check
      _
    $region11: #{tpu_custom_call.1} parent=1 // pred_check_branch
      %41 = sbr.rel (0) target = $region13
    $region12: #{tpu_custom_call.1} parent=1 // pred_region
      _
    $region13: #{tpu_custom_call.1} parent=1 // pred_fallthru
      _
    // Predicated region
    $region14: #{tpu_custom_call.1} parent=1 // pred_check
      _
    $region15: #{tpu_custom_call.1} parent=1 // pred_check_branch
      %43 = sbr.rel (0) target = $region17
    $region16: #{tpu_custom_call.1} parent=1 // pred_region
      %s45 = ssub.s32 2048, 2048
      %46 = vsyncadd [#allocation6], %s45
      %s47 = sshll.u32 [#allocation7], 4
      %s48 = int_to_ptr.vmem [resolvable:$true] %s47
      %53 = dma.hbm_to_vmem [thread:$0]  %s3, 2048, %s48, [#allocation6], 128, 128, 8
    $region17: #{tpu_custom_call.1} parent=1 // pred_fallthru
      _
    // Predicated region
    $region18: #{tpu_custom_call.1} parent=1 // pred_check
      _
    $region19: #{tpu_custom_call.1} parent=1 // pred_check_branch
      %55 = sbr.rel (0) target = $region21
    $region20: #{tpu_custom_call.1} parent=1 // pred_region
      _
    $region21: #{tpu_custom_call.1} parent=1 // pred_fallthru
      _
    // Predicated region
    $region22: #{tpu_custom_call.1} parent=1 // pred_check
      _
    $region23: #{tpu_custom_call.1} parent=1 // pred_check_branch
      %57 = sbr.rel (0) target = $region25
    $region24: #{tpu_custom_call.1} parent=1 // pred_region
      %s59 = ssub.s32 2048, 2048
      %60 = vsyncadd [#allocation9], %s59
      %s61 = sshll.u32 [#allocation8], 4
      %s62 = int_to_ptr.vmem [resolvable:$true] %s61
      %67 = dma.hbm_to_vmem [thread:$0]  %s5, 2048, %s62, [#allocation9], 64, 64, 4
    $region25: #{tpu_custom_call.1} parent=1 // pred_fallthru
      _
    // Predicated region
    $region26: #{tpu_custom_call.1} parent=1 // pred_check
      _
    $region27: #{tpu_custom_call.1} parent=1 // pred_check_branch
      %69 = sbr.rel (0) target = $region29
    $region28: #{tpu_custom_call.1} parent=1 // pred_region
      _
    $region29: #{tpu_custom_call.1} parent=1 // pred_fallthru
      _
    // Predicated region
    $region30: #{tpu_custom_call.1} parent=1 // pred_check
      _
    $region31: #{tpu_custom_call.1} parent=1 // pred_check_branch
      %71 = sbr.rel (0) target = $region33
    $region32: #{tpu_custom_call.1} parent=1 // pred_region
      %s73 = ssub.s32 1024, 1024
      %74 = vsyncadd [#allocation9], %s73
      %s75 = sshll.u32 [#allocation10], 4
      %s76 = int_to_ptr.vmem [resolvable:$true] %s75
      %81 = dma.hbm_to_vmem [thread:$0]  %s7, 1024, %s76, [#allocation9], 64, 64, 4
    $region33: #{tpu_custom_call.1} parent=1 // pred_fallthru
      _
    // Predicated region
    $region34: #{tpu_custom_call.1} parent=1 // pred_check
      _
    $region35: #{tpu_custom_call.1} parent=1 // pred_check_branch
      %83 = sbr.rel (0) target = $region37
    $region36: #{tpu_custom_call.1} parent=1 // pred_region
      _
    $region37: #{tpu_custom_call.1} parent=1 // pred_fallthru
      _
    // Predicated region
    $region38: #{tpu_custom_call.1} parent=1 // pred_check
      _
    $region39: #{tpu_custom_call.1} parent=1 // pred_check_branch
      %85 = sbr.rel (0) target = $region41
    $region40: #{tpu_custom_call.1} parent=1 // pred_region
      %86 = dma.done [#allocation3], 256
    $region41: #{tpu_custom_call.1} parent=1 // pred_fallthru
      _
    // Predicated region
    $region42: #{tpu_custom_call.1} parent=1 // pred_check
      _
    $region43: #{tpu_custom_call.1} parent=1 // pred_check_branch
      %88 = sbr.rel (0) target = $region45
    $region44: #{tpu_custom_call.1} parent=1 // pred_region
      %89 = dma.done [#allocation6], 2048
    $region45: #{tpu_custom_call.1} parent=1 // pred_fallthru
      _
    // Predicated region
    $region46: #{tpu_custom_call.1} parent=1 // pred_check
      _
    $region47: #{tpu_custom_call.1} parent=1 // pred_check_branch
      %91 = sbr.rel (0) target = $region49
    $region48: #{tpu_custom_call.1} parent=1 // pred_region
      %92 = dma.done [#allocation6], 2048
    $region49: #{tpu_custom_call.1} parent=1 // pred_fallthru
      _
    // Predicated region
    $region50: #{tpu_custom_call.1} parent=1 // pred_check
      _
    $region51: #{tpu_custom_call.1} parent=1 // pred_check_branch
      %94 = sbr.rel (0) target = $region53
    $region52: #{tpu_custom_call.1} parent=1 // pred_region
      %95 = dma.done [#allocation9], 2048
    $region53: #{tpu_custom_call.1} parent=1 // pred_fallthru
      _
    // Predicated region
    $region54: #{tpu_custom_call.1} parent=1 // pred_check
      _
    $region55: #{tpu_custom_call.1} parent=1 // pred_check_branch
      %97 = sbr.rel (0) target = $region57
    $region56: #{tpu_custom_call.1} parent=1 // pred_region
      %98 = dma.done [#allocation9], 1024
    $region57: #{tpu_custom_call.1} parent=1 // pred_fallthru
      _
    %v100 = vld [vmem:[#allocation2] sm:$0xff]
    %v101 = vld [vmem:[#allocation2 + $0x8] sm:$0xff]
    %v102 = vpack.c.bf16 %v100, %v100
    %v103 = vpack.c.bf16 %v101, %v101
    %v104 = vld [vmem:[#allocation5] sm:$0xf]
    %v105 = vld [vmem:[#allocation5 + $0x4] sm:$0xf]
    %v106 = vld [vmem:[#allocation5 + $0x8] sm:$0xf]
    %v107 = vld [vmem:[#allocation5 + $0xc] sm:$0xf]
    %v108 = vld [vmem:[#allocation5 + $0x10] sm:$0xf]
    %v109 = vld [vmem:[#allocation5 + $0x14] sm:$0xf]
    %v110 = vld [vmem:[#allocation5 + $0x18] sm:$0xf]
    %v111 = vld [vmem:[#allocation5 + $0x1c] sm:$0xf]
    %v112 = vld [vmem:[#allocation5 + $0x20] sm:$0xf]
    %v113 = vld [vmem:[#allocation5 + $0x24] sm:$0xf]
    %v114 = vld [vmem:[#allocation5 + $0x28] sm:$0xf]
    %v115 = vld [vmem:[#allocation5 + $0x2c] sm:$0xf]
    %v116 = vld [vmem:[#allocation5 + $0x30] sm:$0xf]
    %v117 = vld [vmem:[#allocation5 + $0x34] sm:$0xf]
    %v118 = vld [vmem:[#allocation5 + $0x38] sm:$0xf]
    %v119 = vld [vmem:[#allocation5 + $0x3c] sm:$0xf]
    %v120 = vld [vmem:[#allocation5 + $0x40] sm:$0xf]
    %v121 = vld [vmem:[#allocation5 + $0x44] sm:$0xf]
    %v122 = vld [vmem:[#allocation5 + $0x48] sm:$0xf]
    %v123 = vld [vmem:[#allocation5 + $0x4c] sm:$0xf]
    %v124 = vld [vmem:[#allocation5 + $0x50] sm:$0xf]
    %v125 = vld [vmem:[#allocation5 + $0x54] sm:$0xf]
    %v126 = vld [vmem:[#allocation5 + $0x58] sm:$0xf]
    %v127 = vld [vmem:[#allocation5 + $0x5c] sm:$0xf]
    %v128 = vld [vmem:[#allocation5 + $0x60] sm:$0xf]
    %v129 = vld [vmem:[#allocation5 + $0x64] sm:$0xf]
    %v130 = vld [vmem:[#allocation5 + $0x68] sm:$0xf]
    %v131 = vld [vmem:[#allocation5 + $0x6c] sm:$0xf]
    %v132 = vld [vmem:[#allocation5 + $0x70] sm:$0xf]
    %v133 = vld [vmem:[#allocation5 + $0x74] sm:$0xf]
    %v134 = vld [vmem:[#allocation5 + $0x78] sm:$0xf]
    %v135 = vld [vmem:[#allocation5 + $0x7c] sm:$0xf]
    %v136 = vld [vmem:[%s2] sm:$0x1]
    %v138 = vlaneseq
    %v139 = vshrl.u32 %v138, 7
    %v140 = vsub.s32 0, %v139
    %v141 = vrot.slane %v136, %v140
    %v175 = vunpack.c.l.b16 %v104
    %v176 = vunpack.c.l.b16 %v105
    %v177 = vunpack.c.l.b16 %v106
    %v178 = vunpack.c.l.b16 %v107
    %v179 = vunpack.c.l.b16 %v108
    %v180 = vunpack.c.l.b16 %v109
    %v181 = vunpack.c.l.b16 %v110
    %v182 = vunpack.c.l.b16 %v111
    %v183 = vunpack.c.l.b16 %v112
    %v184 = vunpack.c.l.b16 %v113
    %v185 = vunpack.c.l.b16 %v114
    %v186 = vunpack.c.l.b16 %v115
    %v187 = vunpack.c.l.b16 %v116
    %v188 = vunpack.c.l.b16 %v117
    %v189 = vunpack.c.l.b16 %v118
    %v190 = vunpack.c.l.b16 %v119
    %v191 = vunpack.c.l.b16 %v120
    %v192 = vunpack.c.l.b16 %v121
    %v193 = vunpack.c.l.b16 %v122
    %v194 = vunpack.c.l.b16 %v123
    %v195 = vunpack.c.l.b16 %v124
    %v196 = vunpack.c.l.b16 %v125
    %v197 = vunpack.c.l.b16 %v126
    %v198 = vunpack.c.l.b16 %v127
    %v199 = vunpack.c.l.b16 %v128
    %v200 = vunpack.c.l.b16 %v129
    %v201 = vunpack.c.l.b16 %v130
    %v202 = vunpack.c.l.b16 %v131
    %v203 = vunpack.c.l.b16 %v132
    %v204 = vunpack.c.l.b16 %v133
    %v205 = vunpack.c.l.b16 %v134
    %v206 = vunpack.c.l.b16 %v135
    %v207 = vpack.c.b16 %v176, %v175
    %v208 = vpack.c.b16 %v178, %v177
    %v209 = vpack.c.b16 %v180, %v179
    %v210 = vpack.c.b16 %v182, %v181
    %v211 = vpack.c.b16 %v184, %v183
    %v212 = vpack.c.b16 %v186, %v185
    %v213 = vpack.c.b16 %v188, %v187
    %v214 = vpack.c.b16 %v190, %v189
    %v215 = vpack.c.b16 %v192, %v191
    %v216 = vpack.c.b16 %v194, %v193
    %v217 = vpack.c.b16 %v196, %v195
    %v218 = vpack.c.b16 %v198, %v197
    %v219 = vpack.c.b16 %v200, %v199
    %v220 = vpack.c.b16 %v202, %v201
    %v221 = vpack.c.b16 %v204, %v203
    %v222 = vpack.c.b16 %v206, %v205
    %239 = vmatprep.subr.bf16.mxu0 0
    %240 = vmatpush1.bf16.msra.mxu0 %v207
    %241 = vmatprep.subr.bf16.mxu0 0
    %242 = vmatpush1.bf16.msra.mxu0 %v208
    %243 = vmatprep.subr.bf16.mxu0 0
    %244 = vmatpush1.bf16.msra.mxu0 %v209
    %245 = vmatprep.subr.bf16.mxu0 0
    %246 = vmatpush1.bf16.msra.mxu0 %v210
    %247 = vmatprep.subr.bf16.mxu0 0
    %248 = vmatpush1.bf16.msra.mxu0 %v211
    %249 = vmatprep.subr.bf16.mxu0 0
    %250 = vmatpush1.bf16.msra.mxu0 %v212
    %251 = vmatprep.subr.bf16.mxu0 0
    %252 = vmatpush1.bf16.msra.mxu0 %v213
    %253 = vmatprep.subr.bf16.mxu0 0
    %254 = vmatpush1.bf16.msra.mxu0 %v214
    %255 = vmatprep.subr.bf16.mxu0 0
    %256 = vmatpush1.bf16.msra.mxu0 %v215
    %257 = vmatprep.subr.bf16.mxu0 0
    %258 = vmatpush1.bf16.msra.mxu0 %v216
    %259 = vmatprep.subr.bf16.mxu0 0
    %260 = vmatpush1.bf16.msra.mxu0 %v217
    %261 = vmatprep.subr.bf16.mxu0 0
    %262 = vmatpush1.bf16.msra.mxu0 %v218
    %263 = vmatprep.subr.bf16.mxu0 0
    %264 = vmatpush1.bf16.msra.mxu0 %v219
    %265 = vmatprep.subr.bf16.mxu0 0
    %266 = vmatpush1.bf16.msra.mxu0 %v220
    %267 = vmatprep.subr.bf16.mxu0 0
    %268 = vmatpush1.bf16.msra.mxu0 %v221
    %269 = vmatprep.subr.bf16.mxu0 0
    %270 = vmatpush1.bf16.msra.mxu0 %v222
    %271 = vmatprep.mubr.bf16.mxu0 %v103
    %272 = vmatmul.mubr.bf16.gmra.mrb[0].mxu0 %v102
    %v273 = vpop.f32.mrb[0].mxu0
    %v274 = vadd.f32 %v141, %v273
    %v275 = vpop.f32.mrb[0].mxu0
    %v276 = vpop.f32.mrb[0].mxu0
    %v277 = vpop.f32.mrb[0].mxu0
    %278 = vdwg.mxu0
    %v279 = vmax.f32 %v274, 0.0
    %v280 = vpack.c.bf16 %v279, %v279
    %v281 = vld [vmem:[#allocation7] sm:$0xff]
    %v282 = vld [vmem:[#allocation7 + $0x8] sm:$0xff]
    %v283 = vld [vmem:[#allocation7 + $0x10] sm:$0xff]
    %v284 = vld [vmem:[#allocation7 + $0x18] sm:$0xff]
    %v285 = vld [vmem:[#allocation7 + $0x20] sm:$0xff]
    %v286 = vld [vmem:[#allocation7 + $0x28] sm:$0xff]
    %v287 = vld [vmem:[#allocation7 + $0x30] sm:$0xff]
    %v288 = vld [vmem:[#allocation7 + $0x38] sm:$0xff]
    %v289 = vld [vmem:[#allocation7 + $0x40] sm:$0xff]
    %v290 = vld [vmem:[#allocation7 + $0x48] sm:$0xff]
    %v291 = vld [vmem:[#allocation7 + $0x50] sm:$0xff]
    %v292 = vld [vmem:[#allocation7 + $0x58] sm:$0xff]
    %v293 = vld [vmem:[#allocation7 + $0x60] sm:$0xff]
    %v294 = vld [vmem:[#allocation7 + $0x68] sm:$0xff]
    %v295 = vld [vmem:[#allocation7 + $0x70] sm:$0xff]
    %v296 = vld [vmem:[#allocation7 + $0x78] sm:$0xff]
    %v297 = vld [vmem:[%s4] sm:$0x3]
    %v299 = vlaneseq
    %v300 = vshrl.u32 %v299, 7
    %v301 = vsub.s32 0, %v300
    %v302 = vrot.slane %v297, %v301
    %v303 = vlaneseq
    %v304 = vshrl.u32 %v303, 7
    %v305 = vsub.s32 1, %v304
    %v306 = vrot.slane %v297, %v305
    %v325 = vunpack.c.l.b16 %v281
    %v326 = vunpack.c.h.b16 %v281
    %v327 = vunpack.c.l.b16 %v282
    %v328 = vunpack.c.h.b16 %v282
    %v329 = vunpack.c.l.b16 %v283
    %v330 = vunpack.c.h.b16 %v283
    %v331 = vunpack.c.l.b16 %v284
    %v332 = vunpack.c.h.b16 %v284
    %v333 = vunpack.c.l.b16 %v285
    %v334 = vunpack.c.h.b16 %v285
    %v335 = vunpack.c.l.b16 %v286
    %v336 = vunpack.c.h.b16 %v286
    %v337 = vunpack.c.l.b16 %v287
    %v338 = vunpack.c.h.b16 %v287
    %v339 = vunpack.c.l.b16 %v288
    %v340 = vunpack.c.h.b16 %v288
    %v341 = vunpack.c.l.b16 %v289
    %v342 = vunpack.c.h.b16 %v289
    %v343 = vunpack.c.l.b16 %v290
    %v344 = vunpack.c.h.b16 %v290
    %v345 = vunpack.c.l.b16 %v291
    %v346 = vunpack.c.h.b16 %v291
    %v347 = vunpack.c.l.b16 %v292
    %v348 = vunpack.c.h.b16 %v292
    %v349 = vunpack.c.l.b16 %v293
    %v350 = vunpack.c.h.b16 %v293
    %v351 = vunpack.c.l.b16 %v294
    %v352 = vunpack.c.h.b16 %v294
    %v353 = vunpack.c.l.b16 %v295
    %v354 = vunpack.c.h.b16 %v295
    %v355 = vunpack.c.l.b16 %v296
    %v356 = vunpack.c.h.b16 %v296
    %v357 = vpack.c.b16 %v327, %v325
    %v358 = vpack.c.b16 %v328, %v326
    %v359 = vpack.c.b16 %v331, %v329
    %v360 = vpack.c.b16 %v332, %v330
    %v361 = vpack.c.b16 %v335, %v333
    %v362 = vpack.c.b16 %v336, %v334
    %v363 = vpack.c.b16 %v339, %v337
    %v364 = vpack.c.b16 %v340, %v338
    %v365 = vpack.c.b16 %v343, %v341
    %v366 = vpack.c.b16 %v344, %v342
    %v367 = vpack.c.b16 %v347, %v345
    %v368 = vpack.c.b16 %v348, %v346
    %v369 = vpack.c.b16 %v351, %v349
    %v370 = vpack.c.b16 %v352, %v350
    %v371 = vpack.c.b16 %v355, %v353
    %v372 = vpack.c.b16 %v356, %v354
    %389 = vmatprep.subr.bf16.mxu0 %v358
    %390 = vmatpush1.bf16.msra.mxu0 %v357
    %391 = vmatprep.subr.bf16.mxu0 %v360
    %392 = vmatpush1.bf16.msra.mxu0 %v359
    %393 = vmatprep.subr.bf16.mxu0 %v362
    %394 = vmatpush1.bf16.msra.mxu0 %v361
    %395 = vmatprep.subr.bf16.mxu0 %v364
    %396 = vmatpush1.bf16.msra.mxu0 %v363
    %397 = vmatprep.subr.bf16.mxu0 %v366
    %398 = vmatpush1.bf16.msra.mxu0 %v365
    %399 = vmatprep.subr.bf16.mxu0 %v368
    %400 = vmatpush1.bf16.msra.mxu0 %v367
    %401 = vmatprep.subr.bf16.mxu0 %v370
    %402 = vmatpush1.bf16.msra.mxu0 %v369
    %403 = vmatprep.subr.bf16.mxu0 %v372
    %404 = vmatpush1.bf16.msra.mxu0 %v371
    %405 = vmatprep.subr.bf16.mxu0 0
    %406 = vmatpush1.bf16.msra.mxu0 0
    %407 = vmatprep.subr.bf16.mxu0 0
    %408 = vmatpush1.bf16.msra.mxu0 0
    %409 = vmatprep.subr.bf16.mxu0 0
    %410 = vmatpush1.bf16.msra.mxu0 0
    %411 = vmatprep.subr.bf16.mxu0 0
    %412 = vmatpush1.bf16.msra.mxu0 0
    %413 = vmatprep.subr.bf16.mxu0 0
    %414 = vmatpush1.bf16.msra.mxu0 0
    %415 = vmatprep.subr.bf16.mxu0 0
    %416 = vmatpush1.bf16.msra.mxu0 0
    %417 = vmatprep.subr.bf16.mxu0 0
    %418 = vmatpush1.bf16.msra.mxu0 0
    %419 = vmatprep.subr.bf16.mxu0 0
    %420 = vmatpush1.bf16.msra.mxu0 0
    %421 = vmatprep.mubr.bf16.mxu0 0
    %422 = vmatmul.mubr.bf16.gmra.mrb[0].mxu0 %v280
    %v423 = vpop.f32.mrb[0].mxu0
    %v424 = vadd.f32 %v302, %v423
    %v425 = vpop.f32.mrb[0].mxu0
    %v426 = vadd.f32 %v306, %v425
    %v427 = vpop.f32.mrb[0].mxu0
    %v428 = vpop.f32.mrb[0].mxu0
    %429 = vdwg.mxu0
    %v430 = vmax.f32 %v424, 0.0
    %v431 = vmax.f32 %v426, 0.0
    %v432 = vpack.c.bf16 %v430, %v430
    %v433 = vpack.c.bf16 %v431, %v431
    %v434 = vld [vmem:[#allocation8] sm:$0xf]
    %v435 = vld [vmem:[#allocation8 + $0x4] sm:$0xf]
    %v436 = vld [vmem:[#allocation8 + $0x8] sm:$0xf]
    %v437 = vld [vmem:[#allocation8 + $0xc] sm:$0xf]
    %v438 = vld [vmem:[#allocation8 + $0x10] sm:$0xf]
    %v439 = vld [vmem:[#allocation8 + $0x14] sm:$0xf]
    %v440 = vld [vmem:[#allocation8 + $0x18] sm:$0xf]
    %v441 = vld [vmem:[#allocation8 + $0x1c] sm:$0xf]
    %v442 = vld [vmem:[#allocation8 + $0x20] sm:$0xf]
    %v443 = vld [vmem:[#allocation8 + $0x24] sm:$0xf]
    %v444 = vld [vmem:[#allocation8 + $0x28] sm:$0xf]
    %v445 = vld [vmem:[#allocation8 + $0x2c] sm:$0xf]
    %v446 = vld [vmem:[#allocation8 + $0x30] sm:$0xf]
    %v447 = vld [vmem:[#allocation8 + $0x34] sm:$0xf]
    %v448 = vld [vmem:[#allocation8 + $0x38] sm:$0xf]
    %v449 = vld [vmem:[#allocation8 + $0x3c] sm:$0xf]
    %v450 = vld [vmem:[#allocation8 + $0x40] sm:$0xf]
    %v451 = vld [vmem:[#allocation8 + $0x44] sm:$0xf]
    %v452 = vld [vmem:[#allocation8 + $0x48] sm:$0xf]
    %v453 = vld [vmem:[#allocation8 + $0x4c] sm:$0xf]
    %v454 = vld [vmem:[#allocation8 + $0x50] sm:$0xf]
    %v455 = vld [vmem:[#allocation8 + $0x54] sm:$0xf]
    %v456 = vld [vmem:[#allocation8 + $0x58] sm:$0xf]
    %v457 = vld [vmem:[#allocation8 + $0x5c] sm:$0xf]
    %v458 = vld [vmem:[#allocation8 + $0x60] sm:$0xf]
    %v459 = vld [vmem:[#allocation8 + $0x64] sm:$0xf]
    %v460 = vld [vmem:[#allocation8 + $0x68] sm:$0xf]
    %v461 = vld [vmem:[#allocation8 + $0x6c] sm:$0xf]
    %v462 = vld [vmem:[#allocation8 + $0x70] sm:$0xf]
    %v463 = vld [vmem:[#allocation8 + $0x74] sm:$0xf]
    %v464 = vld [vmem:[#allocation8 + $0x78] sm:$0xf]
    %v465 = vld [vmem:[#allocation8 + $0x7c] sm:$0xf]
    %v466 = vld [vmem:[%s6] sm:$0x1]
    %v468 = vlaneseq
    %v469 = vshrl.u32 %v468, 7
    %v470 = vsub.s32 0, %v469
    %v471 = vrot.slane %v466, %v470
    %v505 = vunpack.c.l.b16 %v434
    %v506 = vunpack.c.l.b16 %v435
    %v507 = vunpack.c.l.b16 %v436
    %v508 = vunpack.c.l.b16 %v437
    %v509 = vunpack.c.l.b16 %v438
    %v510 = vunpack.c.l.b16 %v439
    %v511 = vunpack.c.l.b16 %v440
    %v512 = vunpack.c.l.b16 %v441
    %v513 = vunpack.c.l.b16 %v442
    %v514 = vunpack.c.l.b16 %v443
    %v515 = vunpack.c.l.b16 %v444
    %v516 = vunpack.c.l.b16 %v445
    %v517 = vunpack.c.l.b16 %v446
    %v518 = vunpack.c.l.b16 %v447
    %v519 = vunpack.c.l.b16 %v448
    %v520 = vunpack.c.l.b16 %v449
    %v521 = vunpack.c.l.b16 %v450
    %v522 = vunpack.c.l.b16 %v451
    %v523 = vunpack.c.l.b16 %v452
    %v524 = vunpack.c.l.b16 %v453
    %v525 = vunpack.c.l.b16 %v454
    %v526 = vunpack.c.l.b16 %v455
    %v527 = vunpack.c.l.b16 %v456
    %v528 = vunpack.c.l.b16 %v457
    %v529 = vunpack.c.l.b16 %v458
    %v530 = vunpack.c.l.b16 %v459
    %v531 = vunpack.c.l.b16 %v460
    %v532 = vunpack.c.l.b16 %v461
    %v533 = vunpack.c.l.b16 %v462
    %v534 = vunpack.c.l.b16 %v463
    %v535 = vunpack.c.l.b16 %v464
    %v536 = vunpack.c.l.b16 %v465
    %v537 = vpack.c.b16 %v506, %v505
    %v538 = vpack.c.b16 %v508, %v507
    %v539 = vpack.c.b16 %v510, %v509
    %v540 = vpack.c.b16 %v512, %v511
    %v541 = vpack.c.b16 %v514, %v513
    %v542 = vpack.c.b16 %v516, %v515
    %v543 = vpack.c.b16 %v518, %v517
    %v544 = vpack.c.b16 %v520, %v519
    %v545 = vpack.c.b16 %v522, %v521
    %v546 = vpack.c.b16 %v524, %v523
    %v547 = vpack.c.b16 %v526, %v525
    %v548 = vpack.c.b16 %v528, %v527
    %v549 = vpack.c.b16 %v530, %v529
    %v550 = vpack.c.b16 %v532, %v531
    %v551 = vpack.c.b16 %v534, %v533
    %v552 = vpack.c.b16 %v536, %v535
    %569 = vmatprep.subr.bf16.mxu0 0
    %570 = vmatpush1.bf16.msra.mxu0 %v537
    %571 = vmatprep.subr.bf16.mxu0 0
    %572 = vmatpush1.bf16.msra.mxu0 %v538
    %573 = vmatprep.subr.bf16.mxu0 0
    %574 = vmatpush1.bf16.msra.mxu0 %v539
    %575 = vmatprep.subr.bf16.mxu0 0
    %576 = vmatpush1.bf16.msra.mxu0 %v540
    %577 = vmatprep.subr.bf16.mxu0 0
    %578 = vmatpush1.bf16.msra.mxu0 %v541
    %579 = vmatprep.subr.bf16.mxu0 0
    %580 = vmatpush1.bf16.msra.mxu0 %v542
    %581 = vmatprep.subr.bf16.mxu0 0
    %582 = vmatpush1.bf16.msra.mxu0 %v543
    %583 = vmatprep.subr.bf16.mxu0 0
    %584 = vmatpush1.bf16.msra.mxu0 %v544
    %585 = vmatprep.subr.bf16.mxu0 0
    %586 = vmatpush1.bf16.msra.mxu0 %v545
    %587 = vmatprep.subr.bf16.mxu0 0
    %588 = vmatpush1.bf16.msra.mxu0 %v546
    %589 = vmatprep.subr.bf16.mxu0 0
    %590 = vmatpush1.bf16.msra.mxu0 %v547
    %591 = vmatprep.subr.bf16.mxu0 0
    %592 = vmatpush1.bf16.msra.mxu0 %v548
    %593 = vmatprep.subr.bf16.mxu0 0
    %594 = vmatpush1.bf16.msra.mxu0 %v549
    %595 = vmatprep.subr.bf16.mxu0 0
    %596 = vmatpush1.bf16.msra.mxu0 %v550
    %597 = vmatprep.subr.bf16.mxu0 0
    %598 = vmatpush1.bf16.msra.mxu0 %v551
    %599 = vmatprep.subr.bf16.mxu0 0
    %600 = vmatpush1.bf16.msra.mxu0 %v552
    %601 = vmatprep.mubr.bf16.mxu0 %v433
    %602 = vmatmul.mubr.bf16.gmra.mrb[0].mxu0 %v432
    %v603 = vpop.f32.mrb[0].mxu0
    %v604 = vadd.f32 %v471, %v603
    %v605 = vpop.f32.mrb[0].mxu0
    %v606 = vpop.f32.mrb[0].mxu0
    %v607 = vpop.f32.mrb[0].mxu0
    %608 = vdwg.mxu0
    %v609 = vmax.f32 %v604, 0.0
    %v610 = vpack.c.bf16 %v609, %v609
    %v611 = vld [vmem:[#allocation10] sm:$0xf]
    %v612 = vld [vmem:[#allocation10 + $0x4] sm:$0xf]
    %v613 = vld [vmem:[#allocation10 + $0x8] sm:$0xf]
    %v614 = vld [vmem:[#allocation10 + $0xc] sm:$0xf]
    %v615 = vld [vmem:[#allocation10 + $0x10] sm:$0xf]
    %v616 = vld [vmem:[#allocation10 + $0x14] sm:$0xf]
    %v617 = vld [vmem:[#allocation10 + $0x18] sm:$0xf]
    %v618 = vld [vmem:[#allocation10 + $0x1c] sm:$0xf]
    %v619 = vld [vmem:[#allocation10 + $0x20] sm:$0xf]
    %v620 = vld [vmem:[#allocation10 + $0x24] sm:$0xf]
    %v621 = vld [vmem:[#allocation10 + $0x28] sm:$0xf]
    %v622 = vld [vmem:[#allocation10 + $0x2c] sm:$0xf]
    %v623 = vld [vmem:[#allocation10 + $0x30] sm:$0xf]
    %v624 = vld [vmem:[#allocation10 + $0x34] sm:$0xf]
    %v625 = vld [vmem:[#allocation10 + $0x38] sm:$0xf]
    %v626 = vld [vmem:[#allocation10 + $0x3c] sm:$0xf]
    %v627 = vld [vmem:[%s8] sm:$0x1]
    %v629 = vlaneseq
    %v630 = vshrl.u32 %v629, 7
    %v631 = vsub.s32 0, %v630
    %v632 = vrot.slane %v627, %v631
    %v650 = vunpack.c.l.b16 %v611
    %v651 = vunpack.c.l.b16 %v612
    %v652 = vunpack.c.l.b16 %v613
    %v653 = vunpack.c.l.b16 %v614
    %v654 = vunpack.c.l.b16 %v615
    %v655 = vunpack.c.l.b16 %v616
    %v656 = vunpack.c.l.b16 %v617
    %v657 = vunpack.c.l.b16 %v618
    %v658 = vunpack.c.l.b16 %v619
    %v659 = vunpack.c.l.b16 %v620
    %v660 = vunpack.c.l.b16 %v621
    %v661 = vunpack.c.l.b16 %v622
    %v662 = vunpack.c.l.b16 %v623
    %v663 = vunpack.c.l.b16 %v624
    %v664 = vunpack.c.l.b16 %v625
    %v665 = vunpack.c.l.b16 %v626
    %v666 = vpack.c.b16 %v651, %v650
    %v667 = vpack.c.b16 %v653, %v652
    %v668 = vpack.c.b16 %v655, %v654
    %v669 = vpack.c.b16 %v657, %v656
    %v670 = vpack.c.b16 %v659, %v658
    %v671 = vpack.c.b16 %v661, %v660
    %v672 = vpack.c.b16 %v663, %v662
    %v673 = vpack.c.b16 %v665, %v664
    %682 = vmatprep.subr.bf16.mxu0 0
    %683 = vmatpush1.bf16.msra.mxu0 %v666
    %684 = vmatprep.subr.bf16.mxu0 0
    %685 = vmatpush1.bf16.msra.mxu0 %v667
    %686 = vmatprep.subr.bf16.mxu0 0
    %687 = vmatpush1.bf16.msra.mxu0 %v668
    %688 = vmatprep.subr.bf16.mxu0 0
    %689 = vmatpush1.bf16.msra.mxu0 %v669
    %690 = vmatprep.subr.bf16.mxu0 0
    %691 = vmatpush1.bf16.msra.mxu0 %v670
    %692 = vmatprep.subr.bf16.mxu0 0
    %693 = vmatpush1.bf16.msra.mxu0 %v671
    %694 = vmatprep.subr.bf16.mxu0 0
    %695 = vmatpush1.bf16.msra.mxu0 %v672
    %696 = vmatprep.subr.bf16.mxu0 0
    %697 = vmatpush1.bf16.msra.mxu0 %v673
    %698 = vmatprep.subr.bf16.mxu0 0
    %699 = vmatpush1.bf16.msra.mxu0 0
    %700 = vmatprep.subr.bf16.mxu0 0
    %701 = vmatpush1.bf16.msra.mxu0 0
    %702 = vmatprep.subr.bf16.mxu0 0
    %703 = vmatpush1.bf16.msra.mxu0 0
    %704 = vmatprep.subr.bf16.mxu0 0
    %705 = vmatpush1.bf16.msra.mxu0 0
    %706 = vmatprep.subr.bf16.mxu0 0
    %707 = vmatpush1.bf16.msra.mxu0 0
    %708 = vmatprep.subr.bf16.mxu0 0
    %709 = vmatpush1.bf16.msra.mxu0 0
    %710 = vmatprep.subr.bf16.mxu0 0
    %711 = vmatpush1.bf16.msra.mxu0 0
    %712 = vmatprep.subr.bf16.mxu0 0
    %713 = vmatpush1.bf16.msra.mxu0 0
    %714 = vmatprep.mubr.bf16.mxu0 0
    %715 = vmatmul.mubr.bf16.gmra.mrb[0].mxu0 %v610
    %v716 = vpop.f32.mrb[0].mxu0
    %v717 = vadd.f32 %v632, %v716
    %v718 = vpop.f32.mrb[0].mxu0
    %v719 = vpop.f32.mrb[0].mxu0
    %v720 = vpop.f32.mrb[0].mxu0
    %721 = vdwg.mxu0
    %v722 = vpack.c.bf16 %v717, %v717
    %723 = vst [vmem:[#allocation11] sm:$0xf] %v722
    // Predicated region
    $region58: #{tpu_custom_call.1} parent=1 // pred_check
      _
    $region59: #{tpu_custom_call.1} parent=1 // pred_check_branch
      %725 = sbr.rel (0) target = $region61
    $region60: #{tpu_custom_call.1} parent=1 // pred_region
      %s727 = ssub.s32 64, 64
      %728 = vsyncadd [#allocation4], %s727
      %s730 = sshll.u32 [#allocation11], 4
      %s731 = int_to_ptr.vmem [resolvable:$true] %s730
      %733 = dma.vmem_to_hbm [thread:$0]  %s731, 64, %s9, [#allocation4]
    $region61: #{tpu_custom_call.1} parent=1 // pred_fallthru
      _
    // Predicated region
    $region62: #{tpu_custom_call.1} parent=1 // pred_check
      _
    $region63: #{tpu_custom_call.1} parent=1 // pred_check_branch
      %735 = sbr.rel (0) target = $region65
    $region64: #{tpu_custom_call.1} parent=1 // pred_region
      %736 = dma.done [#allocation4], 64
    $region65: #{tpu_custom_call.1} parent=1 // pred_fallthru
      _
    %737 = vsyncpa [#allocation3], 1
    %738 = vsyncpa [#allocation6], 1
    %739 = vsyncpa [#allocation9], 1
    %740 = vsyncpa [#allocation4], 1

</llo_original>
